<compile_context>
chip_gen: v7x
topology: tpu7x:2x2x1
jax: 0.10.0
libtpu: 0.0.40
codegen_flags: <defaults>
</compile_context>

<pallas_src>
import jax
import jax.numpy as jnp
import numpy as np
from jax.experimental import pallas as pl
from jax.experimental.pallas import tpu as pltpu


# ----------------------------------------------------------------------------
# Kernel body
# ----------------------------------------------------------------------------
def _make_kernel(tb, N, H4, use_bf16, channel_identity):
    """Kernel for one grid step covering tb batch elements, folded on the lane axis."""
    L = tb * N

    def cast(v):
        return v.astype(jnp.bfloat16) if use_bf16 else v

    def kernel(*refs):
        if channel_identity:
            (x_ref, w1_ref, b1_ref, w2_ref, b2_ref,
             bc_ref, wo_ref, bo_ref, o_ref) = refs
        else:
            (x_ref, w1_ref, b1_ref, w2_ref, b2_ref,
             wct_ref, bc_ref, wo_ref, bo_ref, o_ref) = refs

        x = x_ref[...]                                           # (D, tb*N), lane-dense slab

        # spatial_proj: Linear(D,H) -> LeakyReLU(0.01) -> Linear(H,H//4); one wide GEMM each.
        h1 = jnp.dot(w1_ref[...], x, preferred_element_type=jnp.float32) + b1_ref[...]   # (H, L)
        h1 = jnp.where(h1 > 0, h1, jnp.float32(0.01) * h1)
        t = jnp.dot(w2_ref[...], cast(h1),
                    preferred_element_type=jnp.float32) + b2_ref[...]                    # (H4, L)

        # channel mixing: z = t + t @ Wc^T + bc  (per batch, over the node axis)
        if channel_identity:
            z = t + t + bc_ref[...]                              # Wc == I: skip the (N,N) GEMM
        else:
            tc = cast(t)
            if tb == 1:
                mix = jnp.dot(tc, wct_ref[...], preferred_element_type=jnp.float32)
            else:
                # Stack the tb per-batch (H4,N) slabs into rows so the (N,N)
                # contraction is issued as ONE (tb*H4, N)@(N, N) matmul.
                stacked = jnp.concatenate(
                    [tc[:, b * N:(b + 1) * N] for b in range(tb)], axis=0)   # (tb*H4, N)
                mix_s = jnp.dot(stacked, wct_ref[...],
                                preferred_element_type=jnp.float32)           # (tb*H4, N)
                mix = jnp.concatenate(
                    [mix_s[b * H4:(b + 1) * H4, :] for b in range(tb)], axis=1)  # (H4, L)
            z = t + mix + bc_ref[...]

        # output_proj: Linear(H//4, O); one wide GEMM, lane-dense f32 store.
        o_ref[...] = jnp.dot(wo_ref[...], cast(z),
                             preferred_element_type=jnp.float32) + bo_ref[...]           # (O, L)

    return kernel


# ----------------------------------------------------------------------------
# Sizing helpers
# ----------------------------------------------------------------------------
def _footprint_bytes(tb, D, N, H, H4, O, x_bytes, w_bytes, channel_identity):
    """Approximate VMEM footprint for one grid step (blocks + weights + temps)."""
    L = tb * N
    blocks = 2 * D * L * x_bytes + 2 * O * L * 4          # double-buffered x block + f32 out block
    weights = (H * D + H4 * H + O * H4) * w_bytes         # resident, single-buffered
    if not channel_identity:
        weights += N * N * w_bytes                         # Wc^T
    biases = (H + H4 + O + L) * 4
    temps = (H + 3 * H4) * L * 4                           # h1, t, mix, z live f32 intermediates
    return blocks + weights + biases + temps


def _pick_tb(B, D, N, H, H4, O, x_bytes, w_bytes, channel_identity,
             budget_bytes, max_tb=64):
    """Largest divisor of B whose footprint fits the budget, preferring a grid
    length >= 2 so both v7x TensorCores get work."""
    cap = min(B, max_tb)
    divisors = [d for d in range(1, cap + 1) if B % d == 0]
    fits = [d for d in divisors
            if _footprint_bytes(d, D, N, H, H4, O, x_bytes, w_bytes,
                                channel_identity) <= budget_bytes]
    if not fits:
        return 1
    pref = [d for d in fits if B // d >= 2]
    return max(pref) if pref else max(fits)


def _concrete(w):
    try:
        return np.asarray(w)            # fails (or traces) for traced values
    except Exception:
        return None


def _is_concrete_identity(w):
    wn = _concrete(w)
    return (wn is not None and wn.ndim == 2 and wn.shape[0] == wn.shape[1]
            and np.array_equal(wn, np.eye(wn.shape[0], dtype=wn.dtype)))


# ----------------------------------------------------------------------------
# Public wrapper
# ----------------------------------------------------------------------------
def ieblock_forward(x, params, *, use_bf16=True, tb=None, channel_identity=None,
                    vmem_budget_bytes=36 * 1024 * 1024):
    """x: [B, input_dim, num_node] (PyTorch layout). Returns [B, output_dim, num_node] f32.

    channel_identity should be computed ONCE at parameter-setup time and passed
    explicitly (under jit the auto-detect sees traced weights and falls back to
    the general path, which is correct but slower).
    """
    w1, b1, w2, b2, wc, bc, wo, bo = params            # natural PyTorch (out,in) shapes
    B, D, N = x.shape
    H = w1.shape[0]
    H4 = w2.shape[0]
    O = wo.shape[0]

    if channel_identity is None:
        channel_identity = _is_concrete_identity(wc)
    elif channel_identity:
        wn = _concrete(wc)                              # guard against a stale flag
        if wn is not None and not np.array_equal(wn, np.eye(wn.shape[0], dtype=wn.dtype)):
            raise ValueError("channel_identity=True but channel_proj.weight is not the identity")

    x_bytes = 2 if use_bf16 else 4
    w_bytes = 2 if use_bf16 else 4
    if tb is None:
        tb = _pick_tb(B, D, N, H, H4, O, x_bytes, w_bytes, channel_identity,
                      vmem_budget_bytes)
    assert B % tb == 0, (B, tb)
    G = B // tb
    L = tb * N
    cdt = jnp.bfloat16 if use_bf16 else jnp.float32

    # Lane-dense slab layout: (G, D, tb*N).  One wrapper-side layout transform
    # (layout plumbing, not compute); every kernel GEMM / store then has lane
    # width tb*N instead of N.
    x_slab = (x.astype(cdt).reshape(G, tb, D, N)
                .transpose(0, 2, 1, 3).reshape(G, D, L))

    # Weights cast once in the wrapper (bf16 fast path halves DMA + residency);
    # biases stay f32 and are pre-shaped for feature-major broadcasting.
    w1c = w1.astype(cdt)
    w2c = w2.astype(cdt)
    woc = wo.astype(cdt)
    b1c = b1.reshape(H, 1).astype(jnp.float32)
    b2c = b2.reshape(H4, 1).astype(jnp.float32)
    boc = bo.reshape(O, 1).astype(jnp.float32)
    bct = jnp.tile(bc.reshape(1, N).astype(jnp.float32), (1, tb))    # (1, tb*N)

    # Grid-invariant operands: whole array resident in VMEM, single-buffered.
    wspec = pl.BlockSpec(memory_space=pltpu.MemorySpace.VMEM)

    in_specs = [pl.BlockSpec((None, D, L), lambda i: (i, 0, 0)),     # x slab, tb batches/step
                wspec, wspec, wspec, wspec]
    args = [x_slab, w1c, b1c, w2c, b2c]
    if not channel_identity:
        in_specs.append(wspec)
        args.append(jnp.transpose(wc).astype(cdt))                   # Wc^T (N, N)
    in_specs += [wspec, wspec, wspec]
    args += [bct, woc, boc]

    # VMEM limit derived from the actual footprint (with headroom), capped so it
    # stays safe on v7x's 64 MiB physical VMEM.
    footprint = _footprint_bytes(tb, D, N, H, H4, O, x_bytes, w_bytes, channel_identity)
    vmem_limit = int(min(max(int(1.5 * footprint) + (4 << 20), 32 << 20), 60 << 20))

    kernel = _make_kernel(tb, N, H4, use_bf16, channel_identity)

    out_slab = pl.pallas_call(
        kernel,
        out_shape=jax.ShapeDtypeStruct((G, O, L), jnp.float32),
        grid=(G,),
        in_specs=in_specs,
        out_specs=pl.BlockSpec((None, O, L), lambda i: (i, 0, 0)),
        compiler_params=pltpu.CompilerParams(
            dimension_semantics=("parallel",),
            vmem_limit_bytes=vmem_limit,
        ),
    )(*args)

    # Undo the slab layout: (G, O, tb*N) -> (B, O, N).
    return (out_slab.reshape(G, O, tb, N)
                    .transpose(0, 2, 1, 3).reshape(B, O, N))


# ----------------------------------------------------------------------------
# Params / reference (for self-contained correctness checks)
# ----------------------------------------------------------------------------
def init_params(key, input_dim, hid_dim, output_dim, num_node):
    """Deterministic synthetic init mirroring the PyTorch module's shapes.
    channel_proj.weight is the identity, exactly as in the module."""
    H4 = hid_dim // 4
    ks = jax.random.split(key, 7)

    def lin(kw, kb, fan_in, fan_out):
        bound = 1.0 / jnp.sqrt(jnp.float32(fan_in))
        w = jax.random.uniform(kw, (fan_out, fan_in), jnp.float32, -bound, bound)
        b = jax.random.uniform(kb, (fan_out,), jnp.float32, -bound, bound)
        return w, b

    w1, b1 = lin(ks[0], ks[1], input_dim, hid_dim)     # spatial_proj[0]
    w2, b2 = lin(ks[2], ks[3], hid_dim, H4)            # spatial_proj[2]
    wc = jnp.eye(num_node, dtype=jnp.float32)          # torch.nn.init.eye_
    nb = 1.0 / jnp.sqrt(jnp.float32(num_node))
    bc = jax.random.uniform(ks[4], (num_node,), jnp.float32, -nb, nb)
    wo, bo = lin(ks[5], ks[6], H4, output_dim)         # output_proj
    return (w1, b1, w2, b2, wc, bc, wo, bo)


def reference_forward(x, params):
    """Pure-JAX reference of the PyTorch forward (for correctness checks)."""
    w1, b1, w2, b2, wc, bc, wo, bo = params
    xt = jnp.transpose(x, (0, 2, 1))                   # (B, N, D)
    h1 = xt @ w1.T + b1
    h1 = jnp.where(h1 > 0, h1, 0.01 * h1)              # LeakyReLU(0.01)
    h = h1 @ w2.T + b2                                 # (B, N, H4)
    t = jnp.transpose(h, (0, 2, 1))                    # (B, H4, N)
    z = t + (t @ wc.T + bc)                            # channel_proj over last dim N
    out = jnp.transpose(z, (0, 2, 1)) @ wo.T + bo      # (B, N, O)
    return jnp.transpose(out, (0, 2, 1))               # (B, O, N)


if __name__ == "__main__":
    B, input_dim, hid_dim, output_dim, num_node = 4, 16, 32, 16, 8

    key = jax.random.PRNGKey(0)
    kx, kp, kc = jax.random.split(key, 3)
    x = jax.random.normal(kx, (B, input_dim, num_node), jnp.float32)
    params = init_params(kp, input_dim, hid_dim, output_dim, num_node)

    # 1) f32 path, identity channel weight (flag passed explicitly -> (N,N) GEMM skipped).
    out1 = jax.block_until_ready(
        ieblock_forward(x, params, use_bf16=False, channel_identity=True))
    with jax.default_matmul_precision("float32"):
        ref1 = jax.block_until_ready(reference_forward(x, params))
    assert out1.shape == (B, output_dim, num_node), out1.shape
    assert jnp.allclose(out1, ref1, atol=1e-3, rtol=1e-3), \
        float(jnp.max(jnp.abs(out1 - ref1)))

    # 2) f32 path, general non-identity channel weight; multi-step grid (tb picked so B//tb>=2).
    wc2 = params[4] + 0.05 * jax.random.normal(kc, params[4].shape, jnp.float32)
    params2 = params[:4] + (wc2,) + params[5:]
    out2 = jax.block_until_ready(
        ieblock_forward(x, params2, use_bf16=False, channel_identity=False))
    with jax.default_matmul_precision("float32"):
        ref2 = jax.block_until_ready(reference_forward(x, params2))
    assert jnp.allclose(out2, ref2, atol=1e-3, rtol=1e-3), \
        float(jnp.max(jnp.abs(out2 - ref2)))

    # 3) Default bf16 fast path (bf16 MXU operands cast once in the wrapper,
    #    f32 accumulation + f32 elementwise); tolerance reflects bf16 input rounding.
    out3 = jax.block_until_ready(ieblock_forward(x, params2))
    assert jnp.allclose(out3, ref2, atol=5e-2, rtol=5e-2), \
        float(jnp.max(jnp.abs(out3 - ref2)))

    print("KERNEL_OK")
</pallas_src>

<mosaic_0001>
module attributes {stable_mosaic.version = 11 : i64} {
  func.func @kernel(%arg0: i32, %arg1: memref<1x16x16xf32, #tpu.memory_space<vmem>>, %arg2: memref<32x16xf32, #tpu.memory_space<vmem>>, %arg3: memref<32x1xf32, #tpu.memory_space<vmem>>, %arg4: memref<8x32xf32, #tpu.memory_space<vmem>>, %arg5: memref<8x1xf32, #tpu.memory_space<vmem>>, %arg6: memref<1x16xf32, #tpu.memory_space<vmem>>, %arg7: memref<16x8xf32, #tpu.memory_space<vmem>>, %arg8: memref<16x1xf32, #tpu.memory_space<vmem>>, %arg9: memref<1x16x16xf32, #tpu.memory_space<vmem>>) attributes {dimension_semantics = [#tpu.dimension_semantics<parallel>], iteration_bounds = array<i64: 2>, scalar_prefetch = 0 : i64, scratch_operands = 0 : i64, tpu.core_type = #tpu.core_type<tc>, window_params = [{transform_indices = @transform_0, window_bounds = array<i64: 1, 16, 16>}, {pipeline_mode = #tpu.pipeline_mode<synchronous>, transform_indices = @transform_1, window_bounds = array<i64: 32, 16>}, {pipeline_mode = #tpu.pipeline_mode<synchronous>, transform_indices = @transform_2, window_bounds = array<i64: 32, 1>}, {pipeline_mode = #tpu.pipeline_mode<synchronous>, transform_indices = @transform_3, window_bounds = array<i64: 8, 32>}, {pipeline_mode = #tpu.pipeline_mode<synchronous>, transform_indices = @transform_4, window_bounds = array<i64: 8, 1>}, {pipeline_mode = #tpu.pipeline_mode<synchronous>, transform_indices = @transform_5, window_bounds = array<i64: 1, 16>}, {pipeline_mode = #tpu.pipeline_mode<synchronous>, transform_indices = @transform_6, window_bounds = array<i64: 16, 8>}, {pipeline_mode = #tpu.pipeline_mode<synchronous>, transform_indices = @transform_7, window_bounds = array<i64: 16, 1>}, {transform_indices = @transform_8, window_bounds = array<i64: 1, 16, 16>}]} {
    %c0 = arith.constant 0 : index
    %c0_0 = arith.constant 0 : index
    %c0_1 = arith.constant 0 : index
    %0 = vector.load %arg1[%c0, %c0_0, %c0_1] : memref<1x16x16xf32, #tpu.memory_space<vmem>>, vector<1x16x16xf32>
    %1 = vector.shape_cast %0 : vector<1x16x16xf32> to vector<16x16xf32>
    %c0_2 = arith.constant 0 : index
    %c0_3 = arith.constant 0 : index
    %2 = vector.load %arg2[%c0_2, %c0_3] : memref<32x16xf32, #tpu.memory_space<vmem>>, vector<32x16xf32>
    %cst = arith.constant dense<0.000000e+00> : vector<32x16xf32>
    %3 = tpu.matmul %2, %1, %cst {dimension_numbers = #tpu.dot_dimension_numbers<[1], [0], [0], [1], [0, 0, 1, 1], [], []>} : vector<32x16xf32>, vector<16x16xf32>, vector<32x16xf32> -> vector<32x16xf32>
    %c0_4 = arith.constant 0 : index
    %c0_5 = arith.constant 0 : index
    %4 = vector.load %arg3[%c0_4, %c0_5] : memref<32x1xf32, #tpu.memory_space<vmem>>, vector<32x1xf32>
    %5 = vector.broadcast %4 : vector<32x1xf32> to vector<32x16xf32>
    %6 = arith.addf %3, %5 : vector<32x16xf32>
    %cst_6 = arith.constant 0.000000e+00 : f32
    %7 = vector.broadcast %cst_6 : f32 to vector<32x16xf32>
    %8 = arith.cmpf ogt, %6, %7 : vector<32x16xf32>
    %cst_7 = arith.constant 0.00999999977 : f32
    %9 = vector.broadcast %cst_7 : f32 to vector<32x16xf32>
    %10 = arith.mulf %9, %6 : vector<32x16xf32>
    %11 = arith.select %8, %6, %10 : vector<32x16xi1>, vector<32x16xf32>
    %c0_8 = arith.constant 0 : index
    %c0_9 = arith.constant 0 : index
    %12 = vector.load %arg4[%c0_8, %c0_9] : memref<8x32xf32, #tpu.memory_space<vmem>>, vector<8x32xf32>
    %cst_10 = arith.constant dense<0.000000e+00> : vector<8x16xf32>
    %13 = tpu.matmul %12, %11, %cst_10 {dimension_numbers = #tpu.dot_dimension_numbers<[1], [0], [0], [1], [0, 0, 1, 1], [], []>} : vector<8x32xf32>, vector<32x16xf32>, vector<8x16xf32> -> vector<8x16xf32>
    %c0_11 = arith.constant 0 : index
    %c0_12 = arith.constant 0 : index
    %14 = vector.load %arg5[%c0_11, %c0_12] : memref<8x1xf32, #tpu.memory_space<vmem>>, vector<8x1xf32>
    %15 = vector.broadcast %14 : vector<8x1xf32> to vector<8x16xf32>
    %16 = arith.addf %13, %15 : vector<8x16xf32>
    %17 = arith.addf %16, %16 : vector<8x16xf32>
    %c0_13 = arith.constant 0 : index
    %c0_14 = arith.constant 0 : index
    %18 = vector.load %arg6[%c0_13, %c0_14] : memref<1x16xf32, #tpu.memory_space<vmem>>, vector<1x16xf32>
    %19 = vector.broadcast %18 : vector<1x16xf32> to vector<8x16xf32>
    %20 = arith.addf %17, %19 : vector<8x16xf32>
    %c0_15 = arith.constant 0 : index
    %c0_16 = arith.constant 0 : index
    %21 = vector.load %arg7[%c0_15, %c0_16] : memref<16x8xf32, #tpu.memory_space<vmem>>, vector<16x8xf32>
    %cst_17 = arith.constant dense<0.000000e+00> : vector<16x16xf32>
    %22 = tpu.matmul %21, %20, %cst_17 {dimension_numbers = #tpu.dot_dimension_numbers<[1], [0], [0], [1], [0, 0, 1, 1], [], []>} : vector<16x8xf32>, vector<8x16xf32>, vector<16x16xf32> -> vector<16x16xf32>
    %c0_18 = arith.constant 0 : index
    %c0_19 = arith.constant 0 : index
    %23 = vector.load %arg8[%c0_18, %c0_19] : memref<16x1xf32, #tpu.memory_space<vmem>>, vector<16x1xf32>
    %24 = vector.broadcast %23 : vector<16x1xf32> to vector<16x16xf32>
    %25 = arith.addf %22, %24 : vector<16x16xf32>
    %c0_20 = arith.constant 0 : index
    %c0_21 = arith.constant 0 : index
    %c0_22 = arith.constant 0 : index
    %26 = vector.load %arg9[%c0_20, %c0_21, %c0_22] : memref<1x16x16xf32, #tpu.memory_space<vmem>>, vector<1x16x16xf32>
    %27 = vector.shape_cast %26 : vector<1x16x16xf32> to vector<16x16xf32>
    %28 = vector.shape_cast %25 : vector<16x16xf32> to vector<1x16x16xf32>
    tpu.vector_store %arg9[%c0_20, %c0_21, %c0_22], %28 {strides = array<i32>} : memref<1x16x16xf32, #tpu.memory_space<vmem>>, vector<1x16x16xf32>,
    return
  }
  func.func @transform_0(%arg0: i32) -> (i32, i32, i32) {
    %c0_i32 = arith.constant 0 : i32
    %c0_i32_0 = arith.constant 0 : i32
    %c0_i32_1 = arith.constant 0 : i32
    return %arg0, %c0_i32, %c0_i32_0 : i32, i32, i32
  }
  func.func @transform_1(%arg0: i32) -> (i32, i32) {
    %c0_i32 = arith.constant 0 : i32
    %c0_i32_0 = arith.constant 0 : i32
    %c0_i32_1 = arith.constant 0 : i32
    return %c0_i32, %c0_i32_0 : i32, i32
  }
  func.func @transform_2(%arg0: i32) -> (i32, i32) {
    %c0_i32 = arith.constant 0 : i32
    %c0_i32_0 = arith.constant 0 : i32
    %c0_i32_1 = arith.constant 0 : i32
    return %c0_i32, %c0_i32_0 : i32, i32
  }
  func.func @transform_3(%arg0: i32) -> (i32, i32) {
    %c0_i32 = arith.constant 0 : i32
    %c0_i32_0 = arith.constant 0 : i32
    %c0_i32_1 = arith.constant 0 : i32
    return %c0_i32, %c0_i32_0 : i32, i32
  }
  func.func @transform_4(%arg0: i32) -> (i32, i32) {
    %c0_i32 = arith.constant 0 : i32
    %c0_i32_0 = arith.constant 0 : i32
    %c0_i32_1 = arith.constant 0 : i32
    return %c0_i32, %c0_i32_0 : i32, i32
  }
  func.func @transform_5(%arg0: i32) -> (i32, i32) {
    %c0_i32 = arith.constant 0 : i32
    %c0_i32_0 = arith.constant 0 : i32
    %c0_i32_1 = arith.constant 0 : i32
    return %c0_i32, %c0_i32_0 : i32, i32
  }
  func.func @transform_6(%arg0: i32) -> (i32, i32) {
    %c0_i32 = arith.constant 0 : i32
    %c0_i32_0 = arith.constant 0 : i32
    %c0_i32_1 = arith.constant 0 : i32
    return %c0_i32, %c0_i32_0 : i32, i32
  }
  func.func @transform_7(%arg0: i32) -> (i32, i32) {
    %c0_i32 = arith.constant 0 : i32
    %c0_i32_0 = arith.constant 0 : i32
    %c0_i32_1 = arith.constant 0 : i32
    return %c0_i32, %c0_i32_0 : i32, i32
  }
  func.func @transform_8(%arg0: i32) -> (i32, i32, i32) {
    %c0_i32 = arith.constant 0 : i32
    %c0_i32_0 = arith.constant 0 : i32
    %c0_i32_1 = arith.constant 0 : i32
    return %arg0, %c0_i32, %c0_i32_0 : i32, i32, i32
  }
}

</mosaic_0001>

<llo_original>
// kernel: tpu_custom_call.1
$region0: #{tpu_custom_call.1}
  #allocation0 [shape = 'u32[]', space=smem, size = 0x4, offset = 0x4, fixed_abs, tag = 'smem constant byte address 0x4 - core index']
  #allocation1 [shape = 'u32[144,128]{1,0:T(1,128)}', space=vmem, size = 0x12000, scoped, tag = 'internal scratch']
  %s0 = inlined_call_operand.vmem [shape: f32[2,16,16], index: 0, kind: input, shape index: {}]
  %s1 = inlined_call_operand.vmem [shape: f32[32,16], index: 1, kind: input, shape index: {}]
  %s2 = inlined_call_operand.vmem [shape: f32[32,1], index: 2, kind: input, shape index: {}]
  %s3 = inlined_call_operand.vmem [shape: f32[8,32], index: 3, kind: input, shape index: {}]
  %s4 = inlined_call_operand.vmem [shape: f32[8,1], index: 4, kind: input, shape index: {}]
  %s5 = inlined_call_operand.vmem [shape: f32[1,16], index: 5, kind: input, shape index: {}]
  %s6 = inlined_call_operand.vmem [shape: f32[16,8], index: 6, kind: input, shape index: {}]
  %s7 = inlined_call_operand.vmem [shape: f32[16,1], index: 7, kind: input, shape index: {}]
  %s8 = inlined_call_operand.hbm [shape: f32[2,16,16], index: 8, kind: output, shape index: {}]
  %s9 = sld [smem:[#allocation0]]
  $region65: #{tpu_custom_call.1} parent=0
    _
  %s11 = ssub.s32 1, %s9
  %s12 = scalar_select 0, %s11, %s9
  $region1: #{tpu_custom_call.1} parent=0
    #allocation2 [shape = 'u8[16384]{0}', space=vmem, size = 0x4000, scoped, tag = 'output window, operand 0']
    #allocation3 [shape = 's32[2]{0}', space=sflag, size = 0x8, scoped, tag = 'scoped memory for tpu_custom_call.1']
    %13 = vsyncpa [#allocation3], 0
    %s14 = scalar_lea.sflag [#allocation3], 1
    %15 = vsyncpa %s14, 0
    loop: start=0, step=1, limit=4
    $region2: #{tpu_custom_call.1} parent=1 // loop_pre_header
      _
    $region3: #{tpu_custom_call.1} parent=1 // loop_header
      %s17 = sphi 0, %s21
      %p18 = scmp.ge.s32.totalorder %s17, 4
      %s27 = sphi 0, %s29
      %s30 = sphi 0, %s27
      %s31 = sphi 0, %s30
      %s47 = sphi 0, %s31
      %s51 = sphi 0, %s51
      %s53 = sphi 0, %s51
      %s54 = sphi 0, %s53
      %s68 = sphi 0, %s54
      %s72 = sphi 0, %s72
      %s74 = sphi 0, %s72
      %s75 = sphi 0, %s74
      %s89 = sphi 0, %s75
      %s93 = sphi 0, %s93
      %s95 = sphi 0, %s93
      %s96 = sphi 0, %s95
      %s110 = sphi 0, %s96
      %s114 = sphi 0, %s114
      %s116 = sphi 0, %s114
      %s117 = sphi 0, %s116
      %s131 = sphi 0, %s117
      %s135 = sphi 0, %s135
      %s137 = sphi 0, %s135
      %s138 = sphi 0, %s137
      %s152 = sphi 0, %s138
      %s156 = sphi 0, %s156
      %s158 = sphi 0, %s156
      %s159 = sphi 0, %s158
      %s173 = sphi 0, %s159
      %s177 = sphi 0, %s177
      %s179 = sphi 0, %s177
      %s180 = sphi 0, %s179
      %s194 = sphi 0, %s180
      %s200 = sphi 0, %s202
      %s203 = sphi 0, %s200
      %s204 = sphi 0, %s203
      %s220 = sphi 0, %s204
    $region4: #{tpu_custom_call.1} parent=1 // loop_header_branch
      %20 = sbr.rel (%p18) target = $region8
    $region5: #{tpu_custom_call.1} parent=1 // loop_body
      %s22 = ssub.s32 %s17, 1
      %s23 = ssub.s32 %s17, 2
      %s24 = sadd.s32 %s17, 1
      %s25 = ssub.s32 %s17, %s24
      %p26 = scmp.eq.s32.totalorder %s25, 0
      %s28 = sadd.s32 %s27, 1
      %s29 = scalar_select %p26, %s27, %s28
      %p32 = pneg %p26
      %p33 = scmp.eq.s32.totalorder %s17, 1
      %p34 = por %p32, %p33
      %p35 = scmp.ne.s32.totalorder %s27, %s30
      %p36 = scmp.eq.s32.totalorder %s17, 0
      %p37 = por %p35, %p36
      %p38 = scmp.ne.s32.totalorder %s27, %s30
      %p39 = scmp.eq.s32.totalorder %s22, 1
      %p40 = por %p38, %p39
      %p41 = scmp.ne.s32.totalorder %s30, %s31
      %p42 = scmp.eq.s32.totalorder %s22, 0
      %p43 = por %p41, %p42
      %p44 = scmp.ne.s32.totalorder %s30, %s31
      %p45 = scmp.eq.s32.totalorder %s23, 1
      %p46 = por %p44, %p45
      %p48 = scmp.ne.s32.totalorder %s31, %s47
      %p49 = scmp.eq.s32.totalorder %s23, 0
      %p50 = por %p48, %p49
      %s52 = sadd.s32 %s51, 1
      %p55 = scmp.eq.s32.totalorder %s17, 1
      %p56 = scmp.ne.s32.totalorder %s51, %s53
      %p57 = scmp.eq.s32.totalorder %s17, 0
      %p58 = por %p56, %p57
      %p59 = scmp.ne.s32.totalorder %s51, %s53
      %p60 = scmp.eq.s32.totalorder %s22, 1
      %p61 = por %p59, %p60
      %p62 = scmp.ne.s32.totalorder %s53, %s54
      %p63 = scmp.eq.s32.totalorder %s22, 0
      %p64 = por %p62, %p63
      %p65 = scmp.ne.s32.totalorder %s53, %s54
      %p66 = scmp.eq.s32.totalorder %s23, 1
      %p67 = por %p65, %p66
      %p69 = scmp.ne.s32.totalorder %s54, %s68
      %p70 = scmp.eq.s32.totalorder %s23, 0
      %p71 = por %p69, %p70
      %s73 = sadd.s32 %s72, 1
      %p76 = scmp.eq.s32.totalorder %s17, 1
      %p77 = scmp.ne.s32.totalorder %s72, %s74
      %p78 = scmp.eq.s32.totalorder %s17, 0
      %p79 = por %p77, %p78
      %p80 = scmp.ne.s32.totalorder %s72, %s74
      %p81 = scmp.eq.s32.totalorder %s22, 1
      %p82 = por %p80, %p81
      %p83 = scmp.ne.s32.totalorder %s74, %s75
      %p84 = scmp.eq.s32.totalorder %s22, 0
      %p85 = por %p83, %p84
      %p86 = scmp.ne.s32.totalorder %s74, %s75
      %p87 = scmp.eq.s32.totalorder %s23, 1
      %p88 = por %p86, %p87
      %p90 = scmp.ne.s32.totalorder %s75, %s89
      %p91 = scmp.eq.s32.totalorder %s23, 0
      %p92 = por %p90, %p91
      %s94 = sadd.s32 %s93, 1
      %p97 = scmp.eq.s32.totalorder %s17, 1
      %p98 = scmp.ne.s32.totalorder %s93, %s95
      %p99 = scmp.eq.s32.totalorder %s17, 0
      %p100 = por %p98, %p99
      %p101 = scmp.ne.s32.totalorder %s93, %s95
      %p102 = scmp.eq.s32.totalorder %s22, 1
      %p103 = por %p101, %p102
      %p104 = scmp.ne.s32.totalorder %s95, %s96
      %p105 = scmp.eq.s32.totalorder %s22, 0
      %p106 = por %p104, %p105
      %p107 = scmp.ne.s32.totalorder %s95, %s96
      %p108 = scmp.eq.s32.totalorder %s23, 1
      %p109 = por %p107, %p108
      %p111 = scmp.ne.s32.totalorder %s96, %s110
      %p112 = scmp.eq.s32.totalorder %s23, 0
      %p113 = por %p111, %p112
      %s115 = sadd.s32 %s114, 1
      %p118 = scmp.eq.s32.totalorder %s17, 1
      %p119 = scmp.ne.s32.totalorder %s114, %s116
      %p120 = scmp.eq.s32.totalorder %s17, 0
      %p121 = por %p119, %p120
      %p122 = scmp.ne.s32.totalorder %s114, %s116
      %p123 = scmp.eq.s32.totalorder %s22, 1
      %p124 = por %p122, %p123
      %p125 = scmp.ne.s32.totalorder %s116, %s117
      %p126 = scmp.eq.s32.totalorder %s22, 0
      %p127 = por %p125, %p126
      %p128 = scmp.ne.s32.totalorder %s116, %s117
      %p129 = scmp.eq.s32.totalorder %s23, 1
      %p130 = por %p128, %p129
      %p132 = scmp.ne.s32.totalorder %s117, %s131
      %p133 = scmp.eq.s32.totalorder %s23, 0
      %p134 = por %p132, %p133
      %s136 = sadd.s32 %s135, 1
      %p139 = scmp.eq.s32.totalorder %s17, 1
      %p140 = scmp.ne.s32.totalorder %s135, %s137
      %p141 = scmp.eq.s32.totalorder %s17, 0
      %p142 = por %p140, %p141
      %p143 = scmp.ne.s32.totalorder %s135, %s137
      %p144 = scmp.eq.s32.totalorder %s22, 1
      %p145 = por %p143, %p144
      %p146 = scmp.ne.s32.totalorder %s137, %s138
      %p147 = scmp.eq.s32.totalorder %s22, 0
      %p148 = por %p146, %p147
      %p149 = scmp.ne.s32.totalorder %s137, %s138
      %p150 = scmp.eq.s32.totalorder %s23, 1
      %p151 = por %p149, %p150
      %p153 = scmp.ne.s32.totalorder %s138, %s152
      %p154 = scmp.eq.s32.totalorder %s23, 0
      %p155 = por %p153, %p154
      %s157 = sadd.s32 %s156, 1
      %p160 = scmp.eq.s32.totalorder %s17, 1
      %p161 = scmp.ne.s32.totalorder %s156, %s158
      %p162 = scmp.eq.s32.totalorder %s17, 0
      %p163 = por %p161, %p162
      %p164 = scmp.ne.s32.totalorder %s156, %s158
      %p165 = scmp.eq.s32.totalorder %s22, 1
      %p166 = por %p164, %p165
      %p167 = scmp.ne.s32.totalorder %s158, %s159
      %p168 = scmp.eq.s32.totalorder %s22, 0
      %p169 = por %p167, %p168
      %p170 = scmp.ne.s32.totalorder %s158, %s159
      %p171 = scmp.eq.s32.totalorder %s23, 1
      %p172 = por %p170, %p171
      %p174 = scmp.ne.s32.totalorder %s159, %s173
      %p175 = scmp.eq.s32.totalorder %s23, 0
      %p176 = por %p174, %p175
      %s178 = sadd.s32 %s177, 1
      %p181 = scmp.eq.s32.totalorder %s17, 1
      %p182 = scmp.ne.s32.totalorder %s177, %s179
      %p183 = scmp.eq.s32.totalorder %s17, 0
      %p184 = por %p182, %p183
      %p185 = scmp.ne.s32.totalorder %s177, %s179
      %p186 = scmp.eq.s32.totalorder %s22, 1
      %p187 = por %p185, %p186
      %p188 = scmp.ne.s32.totalorder %s179, %s180
      %p189 = scmp.eq.s32.totalorder %s22, 0
      %p190 = por %p188, %p189
      %p191 = scmp.ne.s32.totalorder %s179, %s180
      %p192 = scmp.eq.s32.totalorder %s23, 1
      %p193 = por %p191, %p192
      %p195 = scmp.ne.s32.totalorder %s180, %s194
      %p196 = scmp.eq.s32.totalorder %s23, 0
      %p197 = por %p195, %p196
      %s198 = ssub.s32 %s17, %s24
      %p199 = scmp.eq.s32.totalorder %s198, 0
      %s201 = sadd.s32 %s200, 1
      %s202 = scalar_select %p199, %s200, %s201
      %p205 = pneg %p199
      %p206 = scmp.eq.s32.totalorder %s17, 1
      %p207 = por %p205, %p206
      %p208 = scmp.ne.s32.totalorder %s200, %s203
      %p209 = scmp.eq.s32.totalorder %s17, 0
      %p210 = por %p208, %p209
      %p211 = scmp.ne.s32.totalorder %s200, %s203
      %p212 = scmp.eq.s32.totalorder %s22, 1
      %p213 = por %p211, %p212
      %p214 = scmp.ne.s32.totalorder %s203, %s204
      %p215 = scmp.eq.s32.totalorder %s22, 0
      %p216 = por %p214, %p215
      %p217 = scmp.ne.s32.totalorder %s203, %s204
      %p218 = scmp.eq.s32.totalorder %s23, 1
      %p219 = por %p217, %p218
      %p221 = scmp.ne.s32.totalorder %s204, %s220
      %p222 = scmp.eq.s32.totalorder %s23, 0
      %p223 = por %p221, %p222
      %p224 = scmp.le.s32.totalorder 1, %s17
      %p225 = scmp.lt.s32.totalorder %s17, 3
      %p226 = pnand %p224, %p225
      %p227 = pneg %p226
      // Predicated region
      $region9: #{tpu_custom_call.1} parent=5 // pred_check
        _
      $region10: #{tpu_custom_call.1} parent=5 // pred_check_branch
        %229 = sbr.rel (%p226) target = $region12
      $region11: #{tpu_custom_call.1} parent=5 // pred_region
        %s230 = ssub.s32 %s17, 1
        // Predicated region
        $region13: #{tpu_custom_call.1} parent=11 // pred_check
          %p231 = pneg %p64
        $region14: #{tpu_custom_call.1} parent=11 // pred_check_branch
          %233 = sbr.rel (%p231) target = $region16
        $region15: #{tpu_custom_call.1} parent=11 // pred_region
          _
        $region16: #{tpu_custom_call.1} parent=11 // pred_fallthru
          _
        // Predicated region
        $region17: #{tpu_custom_call.1} parent=11 // pred_check
          %p234 = pneg %p85
        $region18: #{tpu_custom_call.1} parent=11 // pred_check_branch
          %236 = sbr.rel (%p234) target = $region20
        $region19: #{tpu_custom_call.1} parent=11 // pred_region
          _
        $region20: #{tpu_custom_call.1} parent=11 // pred_fallthru
          _
        // Predicated region
        $region21: #{tpu_custom_call.1} parent=11 // pred_check
          %p237 = pneg %p106
        $region22: #{tpu_custom_call.1} parent=11 // pred_check_branch
          %239 = sbr.rel (%p237) target = $region24
        $region23: #{tpu_custom_call.1} parent=11 // pred_region
          _
        $region24: #{tpu_custom_call.1} parent=11 // pred_fallthru
          _
        // Predicated region
        $region25: #{tpu_custom_call.1} parent=11 // pred_check
          %p240 = pneg %p127
        $region26: #{tpu_custom_call.1} parent=11 // pred_check_branch
          %242 = sbr.rel (%p240) target = $region28
        $region27: #{tpu_custom_call.1} parent=11 // pred_region
          _
        $region28: #{tpu_custom_call.1} parent=11 // pred_fallthru
          _
        // Predicated region
        $region29: #{tpu_custom_call.1} parent=11 // pred_check
          %p243 = pneg %p148
        $region30: #{tpu_custom_call.1} parent=11 // pred_check_branch
          %245 = sbr.rel (%p243) target = $region32
        $region31: #{tpu_custom_call.1} parent=11 // pred_region
          _
        $region32: #{tpu_custom_call.1} parent=11 // pred_fallthru
          _
        // Predicated region
        $region33: #{tpu_custom_call.1} parent=11 // pred_check
          %p246 = pneg %p169
        $region34: #{tpu_custom_call.1} parent=11 // pred_check_branch
          %248 = sbr.rel (%p246) target = $region36
        $region35: #{tpu_custom_call.1} parent=11 // pred_region
          _
        $region36: #{tpu_custom_call.1} parent=11 // pred_fallthru
          _
        // Predicated region
        $region37: #{tpu_custom_call.1} parent=11 // pred_check
          %p249 = pneg %p190
        $region38: #{tpu_custom_call.1} parent=11 // pred_check_branch
          %251 = sbr.rel (%p249) target = $region40
        $region39: #{tpu_custom_call.1} parent=11 // pred_region
          _
        $region40: #{tpu_custom_call.1} parent=11 // pred_fallthru
          _
      $region12: #{tpu_custom_call.1} parent=5 // pred_fallthru
        _
      %p252 = scmp.lt.s32.totalorder %s17, 2
      // Predicated region
      $region41: #{tpu_custom_call.1} parent=5 // pred_check
        %p253 = pneg %p252
      $region42: #{tpu_custom_call.1} parent=5 // pred_check_branch
        %255 = sbr.rel (%p253) target = $region44
      $region43: #{tpu_custom_call.1} parent=5 // pred_region
        // Predicated region
        $region45: #{tpu_custom_call.1} parent=43 // pred_check
          %p256 = pneg %p37
        $region46: #{tpu_custom_call.1} parent=43 // pred_check_branch
          %258 = sbr.rel (%p256) target = $region48
        $region47: #{tpu_custom_call.1} parent=43 // pred_region
          %p259 = scmp.lt.s32.totalorder %s17, 1
          %s260 = scalar_select %p259, %s17, 1
          %s261 = smul.addr %s260, 2
          %s262 = smul.addr %s261, 8
          %s263 = scalar_lea.vmem %s0, %s262
        $region48: #{tpu_custom_call.1} parent=43 // pred_fallthru
          _
      $region44: #{tpu_custom_call.1} parent=5 // pred_fallthru
        _
      %p264 = scmp.le.s32.totalorder 1, %s17
      %p265 = scmp.lt.s32.totalorder %s17, 3
      %p266 = pnand %p264, %p265
      %p267 = pneg %p266
      // Predicated region
      $region49: #{tpu_custom_call.1} parent=5 // pred_check
        _
      $region50: #{tpu_custom_call.1} parent=5 // pred_check_branch
        %269 = sbr.rel (%p266) target = $region52
      $region51: #{tpu_custom_call.1} parent=5 // pred_region
        %s270 = ssub.s32 %s17, 1
        %p271 = scmp.lt.s32.totalorder %s22, 1
        %s272 = scalar_select %p271, %s22, 1
        %s273 = smul.addr %s272, 2
        %s274 = smul.addr %s273, 8
        %s275 = scalar_lea.vmem %s0, %s274
        %p276 = pneg %p43
        %p277 = pneg %p40
        %p278 = pneg %p64
        %p279 = pneg %p61
        %p280 = pneg %p85
        %p281 = pneg %p82
        %p282 = pneg %p106
        %p283 = pneg %p103
        %p284 = pneg %p127
        %p285 = pneg %p124
        %p286 = pneg %p148
        %p287 = pneg %p145
        %p288 = pneg %p169
        %p289 = pneg %p166
        %p290 = pneg %p190
        %p291 = pneg %p187
        %p292 = pneg %p216
        %p293 = pneg %p213
        %s294 = sand.u32 %s203, 1
        %s295 = scalar_lea.sflag [#allocation3], %s294
        %s296 = sand.u32 %s203, 1
        %s297 = smul.addr %s296, 16
        %s298 = scalar_lea.vmem [#allocation2], %s297
        %p299 = scmp.lt.s32.totalorder %s22, 1
        %s300 = scalar_select %p299, %s22, 1
        %s301 = smul.addr %s300, 2
        %s302 = smul.addr %s301, 8
        %s303 = scalar_lea.vmem %s0, %s302
        %v304 = vld [vmem:[%s303] sm:$0xff]
        %v305 = vld [vmem:[%s303 + $0x8] sm:$0xff]
        %v306 = vld [vmem:[%s1] sm:$0xff]
        %v307 = vld [vmem:[%s1 + $0x8] sm:$0xff]
        %v308 = vld [vmem:[%s1 + $0x10] sm:$0xff]
        %v309 = vld [vmem:[%s1 + $0x18] sm:$0xff]
        %v310 = vld [vmem:[%s2] sm:$0xff]
        %v311 = vld [vmem:[%s2 + $0x8] sm:$0xff]
        %v312 = vld [vmem:[%s2 + $0x10] sm:$0xff]
        %v313 = vld [vmem:[%s2 + $0x18] sm:$0xff]
        %315 = vset.pattern.permute.xlu0 0
        %316 = vperm.xlu0 %315, %v310
        %v317 = vpop.permute.xlu0 %316
        %320 = vset.pattern.permute.xlu0 0
        %321 = vperm.xlu0 %320, %v311
        %v322 = vpop.permute.xlu0 %321
        %325 = vset.pattern.permute.xlu0 0
        %326 = vperm.xlu0 %325, %v312
        %v327 = vpop.permute.xlu0 %326
        %330 = vset.pattern.permute.xlu0 0
        %331 = vperm.xlu0 %330, %v313
        %v332 = vpop.permute.xlu0 %331
        %vm334 = vcmask 130048
        %v336 = vsel %vm334, %v306, 0
        %v339 = vsel %vm334, %v307, 0
        %v342 = vsel %vm334, %v308, 0
        %v345 = vsel %vm334, %v309, 0
        %347 = vmatprep.subr.mxu0 0.0
        %348 = vmatpush1.msra.mxu0 %v304
        %349 = vmatprep.subr.mxu0 0.0
        %350 = vmatpush1.msra.mxu0 %v305
        %351 = vmatprep.subr.mxu0 0.0
        %352 = vmatpush1.msra.mxu0 0.0
        %353 = vmatprep.subr.mxu0 0.0
        %354 = vmatpush1.msra.mxu0 0.0
        %355 = vmatprep.subr.mxu0 0.0
        %356 = vmatpush1.msra.mxu0 0.0
        %357 = vmatprep.subr.mxu0 0.0
        %358 = vmatpush1.msra.mxu0 0.0
        %359 = vmatprep.subr.mxu0 0.0
        %360 = vmatpush1.msra.mxu0 0.0
        %361 = vmatprep.subr.mxu0 0.0
        %362 = vmatpush1.msra.mxu0 0.0
        %363 = vmatprep.subr.mxu0 0.0
        %364 = vmatpush1.msra.mxu0 0.0
        %365 = vmatprep.subr.mxu0 0.0
        %366 = vmatpush1.msra.mxu0 0.0
        %367 = vmatprep.subr.mxu0 0.0
        %368 = vmatpush1.msra.mxu0 0.0
        %369 = vmatprep.subr.mxu0 0.0
        %370 = vmatpush1.msra.mxu0 0.0
        %371 = vmatprep.subr.mxu0 0.0
        %372 = vmatpush1.msra.mxu0 0.0
        %373 = vmatprep.subr.mxu0 0.0
        %374 = vmatpush1.msra.mxu0 0.0
        %375 = vmatprep.subr.mxu0 0.0
        %376 = vmatpush1.msra.mxu0 0.0
        %377 = vmatprep.subr.mxu0 0.0
        %378 = vmatpush1.msra.mxu0 0.0
        %379 = vmatprep.subr.mxu0 0.0
        %380 = vmatpush1.msra.mxu0 0.0
        %381 = vmatprep.subr.mxu0 0.0
        %382 = vmatpush1.msra.mxu0 0.0
        %383 = vmatprep.subr.mxu0 0.0
        %384 = vmatpush1.msra.mxu0 0.0
        %385 = vmatprep.subr.mxu0 0.0
        %386 = vmatpush1.msra.mxu0 0.0
        %387 = vmatprep.subr.mxu0 0.0
        %388 = vmatpush1.msra.mxu0 0.0
        %389 = vmatprep.subr.mxu0 0.0
        %390 = vmatpush1.msra.mxu0 0.0
        %391 = vmatprep.subr.mxu0 0.0
        %392 = vmatpush1.msra.mxu0 0.0
        %393 = vmatprep.subr.mxu0 0.0
        %394 = vmatpush1.msra.mxu0 0.0
        %395 = vmatprep.subr.mxu0 0.0
        %396 = vmatpush1.msra.mxu0 0.0
        %397 = vmatprep.subr.mxu0 0.0
        %398 = vmatpush1.msra.mxu0 0.0
        %399 = vmatprep.subr.mxu0 0.0
        %400 = vmatpush1.msra.mxu0 0.0
        %401 = vmatprep.subr.mxu0 0.0
        %402 = vmatpush1.msra.mxu0 0.0
        %403 = vmatprep.subr.mxu0 0.0
        %404 = vmatpush1.msra.mxu0 0.0
        %405 = vmatprep.subr.mxu0 0.0
        %406 = vmatpush1.msra.mxu0 0.0
        %407 = vmatprep.subr.mxu0 0.0
        %408 = vmatpush1.msra.mxu0 0.0
        %409 = vmatprep.subr.mxu0 0.0
        %410 = vmatpush1.msra.mxu0 0.0
        %411 = vmatprep.mubr.f32.mxu0 0.0
        %412 = vmatmul.mubr.f32.gmra.mrb[0].mxu0 %v336
        %v413 = vpop.f32.mrb[0].mxu0
        %v414 = vadd.f32 %v317, %v413
        %v415 = vpop.f32.mrb[0].mxu0
        %416 = vmatprep.mubr.f32.mxu0 0.0
        %417 = vmatmul.mubr.f32.gmra.mrb[0].mxu0 %v339
        %v418 = vpop.f32.mrb[0].mxu0
        %v419 = vadd.f32 %v322, %v418
        %v420 = vpop.f32.mrb[0].mxu0
        %421 = vmatprep.mubr.f32.mxu0 0.0
        %422 = vmatmul.mubr.f32.gmra.mrb[0].mxu0 %v342
        %v423 = vpop.f32.mrb[0].mxu0
        %v424 = vadd.f32 %v327, %v423
        %v425 = vpop.f32.mrb[0].mxu0
        %426 = vmatprep.mubr.f32.mxu0 0.0
        %427 = vmatmul.mubr.f32.gmra.mrb[0].mxu0 %v345
        %v428 = vpop.f32.mrb[0].mxu0
        %v429 = vadd.f32 %v332, %v428
        %v430 = vpop.f32.mrb[0].mxu0
        %431 = vdwg.mxu0
        %vm432 = vcmp.gt.f32.partialorder %v414, 0.0
        %vm433 = vcmp.gt.f32.partialorder %v419, 0.0
        %vm434 = vcmp.gt.f32.partialorder %v424, 0.0
        %vm435 = vcmp.gt.f32.partialorder %v429, 0.0
        %v436 = vmul.f32 %v414, 0.01
        %v437 = vmul.f32 %v419, 0.01
        %v438 = vmul.f32 %v424, 0.01
        %v439 = vmul.f32 %v429, 0.01
        %v440 = vsel %vm432, %v414, %v436
        %v441 = vsel %vm433, %v419, %v437
        %v442 = vsel %vm434, %v424, %v438
        %v443 = vsel %vm435, %v429, %v439
        %v444 = vld [vmem:[%s3] sm:$0xff]
        %v445 = vld [vmem:[%s4] sm:$0xff]
        %447 = vset.pattern.permute.xlu0 0
        %448 = vperm.xlu0 %447, %v445
        %v449 = vpop.permute.xlu0 %448
        %vm451 = vcmask 261120
        %v453 = vsel %vm451, %v444, 0
        %455 = vmatprep.subr.mxu0 0.0
        %456 = vmatpush1.msra.mxu0 %v440
        %457 = vmatprep.subr.mxu0 0.0
        %458 = vmatpush1.msra.mxu0 %v441
        %459 = vmatprep.subr.mxu0 0.0
        %460 = vmatpush1.msra.mxu0 %v442
        %461 = vmatprep.subr.mxu0 0.0
        %462 = vmatpush1.msra.mxu0 %v443
        %463 = vmatprep.subr.mxu0 0.0
        %464 = vmatpush1.msra.mxu0 0.0
        %465 = vmatprep.subr.mxu0 0.0
        %466 = vmatpush1.msra.mxu0 0.0
        %467 = vmatprep.subr.mxu0 0.0
        %468 = vmatpush1.msra.mxu0 0.0
        %469 = vmatprep.subr.mxu0 0.0
        %470 = vmatpush1.msra.mxu0 0.0
        %471 = vmatprep.subr.mxu0 0.0
        %472 = vmatpush1.msra.mxu0 0.0
        %473 = vmatprep.subr.mxu0 0.0
        %474 = vmatpush1.msra.mxu0 0.0
        %475 = vmatprep.subr.mxu0 0.0
        %476 = vmatpush1.msra.mxu0 0.0
        %477 = vmatprep.subr.mxu0 0.0
        %478 = vmatpush1.msra.mxu0 0.0
        %479 = vmatprep.subr.mxu0 0.0
        %480 = vmatpush1.msra.mxu0 0.0
        %481 = vmatprep.subr.mxu0 0.0
        %482 = vmatpush1.msra.mxu0 0.0
        %483 = vmatprep.subr.mxu0 0.0
        %484 = vmatpush1.msra.mxu0 0.0
        %485 = vmatprep.subr.mxu0 0.0
        %486 = vmatpush1.msra.mxu0 0.0
        %487 = vmatprep.subr.mxu0 0.0
        %488 = vmatpush1.msra.mxu0 0.0
        %489 = vmatprep.subr.mxu0 0.0
        %490 = vmatpush1.msra.mxu0 0.0
        %491 = vmatprep.subr.mxu0 0.0
        %492 = vmatpush1.msra.mxu0 0.0
        %493 = vmatprep.subr.mxu0 0.0
        %494 = vmatpush1.msra.mxu0 0.0
        %495 = vmatprep.subr.mxu0 0.0
        %496 = vmatpush1.msra.mxu0 0.0
        %497 = vmatprep.subr.mxu0 0.0
        %498 = vmatpush1.msra.mxu0 0.0
        %499 = vmatprep.subr.mxu0 0.0
        %500 = vmatpush1.msra.mxu0 0.0
        %501 = vmatprep.subr.mxu0 0.0
        %502 = vmatpush1.msra.mxu0 0.0
        %503 = vmatprep.subr.mxu0 0.0
        %504 = vmatpush1.msra.mxu0 0.0
        %505 = vmatprep.subr.mxu0 0.0
        %506 = vmatpush1.msra.mxu0 0.0
        %507 = vmatprep.subr.mxu0 0.0
        %508 = vmatpush1.msra.mxu0 0.0
        %509 = vmatprep.subr.mxu0 0.0
        %510 = vmatpush1.msra.mxu0 0.0
        %511 = vmatprep.subr.mxu0 0.0
        %512 = vmatpush1.msra.mxu0 0.0
        %513 = vmatprep.subr.mxu0 0.0
        %514 = vmatpush1.msra.mxu0 0.0
        %515 = vmatprep.subr.mxu0 0.0
        %516 = vmatpush1.msra.mxu0 0.0
        %517 = vmatprep.subr.mxu0 0.0
        %518 = vmatpush1.msra.mxu0 0.0
        %519 = vmatprep.mubr.f32.mxu0 0.0
        %520 = vmatmul.mubr.f32.gmra.mrb[0].mxu0 %v453
        %v521 = vpop.f32.mrb[0].mxu0
        %v522 = vadd.f32 %v449, %v521
        %v523 = vpop.f32.mrb[0].mxu0
        %524 = vdwg.mxu0
        %v525 = vadd.f32 %v522, %v522
        %v526 = vld [vmem:[%s5] sm:$0x1]
        %v528 = vlaneseq
        %v529 = vshrl.u32 %v528, 7
        %v530 = vsub.s32 0, %v529
        %v531 = vrot.slane %v526, %v530
        %v533 = vadd.f32 %v525, %v531
        %v534 = vld [vmem:[%s6] sm:$0xff]
        %v535 = vld [vmem:[%s6 + $0x8] sm:$0xff]
        %v536 = vld [vmem:[%s7] sm:$0xff]
        %v537 = vld [vmem:[%s7 + $0x8] sm:$0xff]
        %539 = vset.pattern.permute.xlu0 0
        %540 = vperm.xlu0 %539, %v536
        %v541 = vpop.permute.xlu0 %540
        %544 = vset.pattern.permute.xlu0 0
        %545 = vperm.xlu0 %544, %v537
        %v546 = vpop.permute.xlu0 %545
        %vm548 = vcmask 64512
        %v550 = vsel %vm548, %v534, 0
        %v553 = vsel %vm548, %v535, 0
        %555 = vmatprep.subr.mxu0 0.0
        %556 = vmatpush1.msra.mxu0 %v533
        %557 = vmatprep.subr.mxu0 0.0
        %558 = vmatpush1.msra.mxu0 0.0
        %559 = vmatprep.subr.mxu0 0.0
        %560 = vmatpush1.msra.mxu0 0.0
        %561 = vmatprep.subr.mxu0 0.0
        %562 = vmatpush1.msra.mxu0 0.0
        %563 = vmatprep.subr.mxu0 0.0
        %564 = vmatpush1.msra.mxu0 0.0
        %565 = vmatprep.subr.mxu0 0.0
        %566 = vmatpush1.msra.mxu0 0.0
        %567 = vmatprep.subr.mxu0 0.0
        %568 = vmatpush1.msra.mxu0 0.0
        %569 = vmatprep.subr.mxu0 0.0
        %570 = vmatpush1.msra.mxu0 0.0
        %571 = vmatprep.subr.mxu0 0.0
        %572 = vmatpush1.msra.mxu0 0.0
        %573 = vmatprep.subr.mxu0 0.0
        %574 = vmatpush1.msra.mxu0 0.0
        %575 = vmatprep.subr.mxu0 0.0
        %576 = vmatpush1.msra.mxu0 0.0
        %577 = vmatprep.subr.mxu0 0.0
        %578 = vmatpush1.msra.mxu0 0.0
        %579 = vmatprep.subr.mxu0 0.0
        %580 = vmatpush1.msra.mxu0 0.0
        %581 = vmatprep.subr.mxu0 0.0
        %582 = vmatpush1.msra.mxu0 0.0
        %583 = vmatprep.subr.mxu0 0.0
        %584 = vmatpush1.msra.mxu0 0.0
        %585 = vmatprep.subr.mxu0 0.0
        %586 = vmatpush1.msra.mxu0 0.0
        %587 = vmatprep.subr.mxu0 0.0
        %588 = vmatpush1.msra.mxu0 0.0
        %589 = vmatprep.subr.mxu0 0.0
        %590 = vmatpush1.msra.mxu0 0.0
        %591 = vmatprep.subr.mxu0 0.0
        %592 = vmatpush1.msra.mxu0 0.0
        %593 = vmatprep.subr.mxu0 0.0
        %594 = vmatpush1.msra.mxu0 0.0
        %595 = vmatprep.subr.mxu0 0.0
        %596 = vmatpush1.msra.mxu0 0.0
        %597 = vmatprep.subr.mxu0 0.0
        %598 = vmatpush1.msra.mxu0 0.0
        %599 = vmatprep.subr.mxu0 0.0
        %600 = vmatpush1.msra.mxu0 0.0
        %601 = vmatprep.subr.mxu0 0.0
        %602 = vmatpush1.msra.mxu0 0.0
        %603 = vmatprep.subr.mxu0 0.0
        %604 = vmatpush1.msra.mxu0 0.0
        %605 = vmatprep.subr.mxu0 0.0
        %606 = vmatpush1.msra.mxu0 0.0
        %607 = vmatprep.subr.mxu0 0.0
        %608 = vmatpush1.msra.mxu0 0.0
        %609 = vmatprep.subr.mxu0 0.0
        %610 = vmatpush1.msra.mxu0 0.0
        %611 = vmatprep.subr.mxu0 0.0
        %612 = vmatpush1.msra.mxu0 0.0
        %613 = vmatprep.subr.mxu0 0.0
        %614 = vmatpush1.msra.mxu0 0.0
        %615 = vmatprep.subr.mxu0 0.0
        %616 = vmatpush1.msra.mxu0 0.0
        %617 = vmatprep.subr.mxu0 0.0
        %618 = vmatpush1.msra.mxu0 0.0
        %619 = vmatprep.mubr.f32.mxu0 0.0
        %620 = vmatmul.mubr.f32.gmra.mrb[0].mxu0 %v550
        %v621 = vpop.f32.mrb[0].mxu0
        %v622 = vadd.f32 %v541, %v621
        %v623 = vpop.f32.mrb[0].mxu0
        %624 = vmatprep.mubr.f32.mxu0 0.0
        %625 = vmatmul.mubr.f32.gmra.mrb[0].mxu0 %v553
        %v626 = vpop.f32.mrb[0].mxu0
        %v627 = vadd.f32 %v546, %v626
        %v628 = vpop.f32.mrb[0].mxu0
        %629 = vdwg.mxu0
        %630 = vst.msk [vmem:[%s298] sm:$0xff] %vm334, %v622
        %631 = vst.msk [vmem:[%s298 + $0x8] sm:$0xff] %vm334, %v627
        %s632 = sand.u32 %s203, 1
        %s633 = scalar_lea.sflag [#allocation3], %s632
        %s634 = sand.u32 %s203, 1
        %s635 = smul.addr %s634, 16
        %s636 = scalar_lea.vmem [#allocation2], %s635
        // Predicated region
        $region53: #{tpu_custom_call.1} parent=51 // pred_check
          %p637 = pneg %p213
        $region54: #{tpu_custom_call.1} parent=51 // pred_check_branch
          %639 = sbr.rel (%p637) target = $region56
        $region55: #{tpu_custom_call.1} parent=51 // pred_region
          %s641 = ssub.s32 256, 256
          %642 = vsyncadd %s633, %s641
          %s643 = smul.addr %s22, 2
          %s644 = smul.addr %s643, 128
          %s645 = scalar_lea.hbm %s8, %s644
          %s646 = sshll.u32 %s636, 4
          %s647 = int_to_ptr.vmem [resolvable:$true] %s646
          %652 = dma.vmem_to_hbm [thread:$0]  %s647, 256, %s645, %s633, 128, 128, 8
        $region56: #{tpu_custom_call.1} parent=51 // pred_fallthru
          _
      $region52: #{tpu_custom_call.1} parent=5 // pred_fallthru
        _
      %p653 = scmp.le.s32.totalorder 2, %s17
      // Predicated region
      $region57: #{tpu_custom_call.1} parent=5 // pred_check
        %p654 = pneg %p653
      $region58: #{tpu_custom_call.1} parent=5 // pred_check_branch
        %656 = sbr.rel (%p654) target = $region60
      $region59: #{tpu_custom_call.1} parent=5 // pred_region
        %s657 = ssub.s32 %s17, 2
        // Predicated region
        $region61: #{tpu_custom_call.1} parent=59 // pred_check
          %p658 = pneg %p219
        $region62: #{tpu_custom_call.1} parent=59 // pred_check_branch
          %660 = sbr.rel (%p658) target = $region64
        $region63: #{tpu_custom_call.1} parent=59 // pred_region
          %s661 = sand.u32 %s204, 1
          %s662 = scalar_lea.sflag [#allocation3], %s661
          %s663 = sand.u32 %s204, 1
          %s664 = smul.addr %s663, 16
          %s665 = scalar_lea.vmem [#allocation2], %s664
          %666 = dma.done %s662, 256
        $region64: #{tpu_custom_call.1} parent=59 // pred_fallthru
          _
      $region60: #{tpu_custom_call.1} parent=5 // pred_fallthru
        _
    $region6: #{tpu_custom_call.1} parent=1 // loop_footer
      %s21 = sadd.s32 1, %s17
    $region7: #{tpu_custom_call.1} parent=1 // loop_footer_branch
      %16 = sbr.rel target = $region3
    $region8: #{tpu_custom_call.1} parent=1 // loop_exit
      _
    %667 = vsyncpa [#allocation3], 1
    %s668 = scalar_lea.sflag [#allocation3], 1
    %669 = vsyncpa %s668, 1

</llo_original>
